<compile_context>
chip_gen: v5e
topology: v5e:2x2
jax: 0.10.0
libtpu: 0.0.40
codegen_flags: <defaults>
</compile_context>

<pallas_src>
import functools
import math

import jax
import jax.numpy as jnp
from jax import lax
from jax.experimental import pallas as pl
from jax.experimental.pallas import tpu as pltpu

_LANE = 128      # vreg lane width
_SUBLANE = 8     # vreg sublane height (f32)


def _round_up(n, m):
    return ((n + m - 1) // m) * m


# ---------------------------------------------------------------------------
# Kernel
# ---------------------------------------------------------------------------
def _discriminator_kernel(
    x_ref,        # [tile_b, input_dim] f32   (natural PyTorch layout)
    w_in_ref,     # [hidden, input_dim]       mxu dtype
    w1a_ref, w1b_ref, w2a_ref, w2b_ref,       # [hidden, hidden] mxu dtype
    w_out_ref,    # [1, hidden]               mxu dtype
    b_ref,        # [5, hidden, 1] f32        (b_in, b1a, b1b, b2a, b2b)
    b_out_ref,    # [1, 1] f32
    o_ref,        # [1, tile_b] f32           (lane-dense output row)
    *,
    act_dtype,
):
    mxu_dtype = w_in_ref.dtype

    def matmul(w_ref, a):
        # MXU matmul, f32 accumulation, N = tile_b on the lane axis.
        return jnp.dot(w_ref[...], a.astype(mxu_dtype),
                       preferred_element_type=jnp.float32)

    # fc_in: contract W[hidden, in] dim 1 with x[tile_b, in] dim 1 directly
    # -> [hidden, tile_b]; this consumes x without any host-side transpose.
    h = lax.dot_general(
        w_in_ref[...], x_ref[...].astype(mxu_dtype),
        dimension_numbers=(((1,), (1,)), ((), ())),
        preferred_element_type=jnp.float32)
    h = (h + b_ref[0]).astype(act_dtype)

    def res_block(h, wa_ref, ca, wb_ref, cb):
        y = jnp.maximum(h, 0.0)
        y = (matmul(wa_ref, y) + b_ref[ca]).astype(act_dtype)
        y = jnp.maximum(y, 0.0)
        y = (matmul(wb_ref, y) + b_ref[cb]).astype(act_dtype)
        return y + h                       # skip = Identity (in_dim == out_dim)

    h = res_block(h, w1a_ref, 1, w1b_ref, 2)
    h = res_block(h, w2a_ref, 3, w2b_ref, 4)

    out = matmul(w_out_ref, h) + b_out_ref[...]     # [1, tile_b] f32
    o_ref[...] = out.astype(o_ref.dtype)


# ---------------------------------------------------------------------------
# Parameter packing (hoisted out of the per-call path)
# ---------------------------------------------------------------------------
def pack_params(params, mxu_dtype=jnp.bfloat16):
    """One-time packing: weights -> MXU dtype, biases -> one [5, hidden, 1] array."""
    def w(name):
        return jnp.asarray(params[name], mxu_dtype)

    b_packed = jnp.stack(
        [params["b_in"], params["b1a"], params["b1b"],
         params["b2a"], params["b2b"]], axis=0
    )[:, :, None].astype(jnp.float32)                    # [5, hidden, 1]
    b_out = jnp.asarray(params["b_out"], jnp.float32).reshape(1, 1)
    return (w("w_in"), w("w1a"), w("w1b"), w("w2a"), w("w2b"), w("w_out"),
            b_packed, b_out)


def _default_act_dtype():
    """bf16 elementwise only on chips with a bf16 VALU (v6e / v7x); f32 on v5e."""
    try:
        kind = jax.devices()[0].device_kind.lower()
    except Exception:
        return jnp.float32
    if "v6" in kind or "v7" in kind or "7x" in kind:
        return jnp.bfloat16
    return jnp.float32


# ---------------------------------------------------------------------------
# VMEM-aware tiling
# ---------------------------------------------------------------------------
_VMEM_TILE_BUDGET = 40 * 1024 * 1024   # keeps tiles safe under v7x's 64 MiB VMEM


def _per_sample_vmem_bytes(input_dim, hidden_dim):
    hp = _round_up(hidden_dim, _SUBLANE)
    return (2 * _round_up(input_dim, _LANE) * 4   # double-buffered x tile (lane-padded, f32)
            + 6 * hp * 4                          # live f32 activation temporaries
            + 2 * _SUBLANE * 4)                   # double-buffered [1, tile_b] output


def _choose_tiling(B, input_dim, hidden_dim, tile_b=None):
    """Returns (tile_b, grid_n, padded_B)."""
    if tile_b is not None:
        grid_n = pl.cdiv(B, tile_b)
        return tile_b, grid_n, tile_b * grid_n
    cap = _VMEM_TILE_BUDGET // _per_sample_vmem_bytes(input_dim, hidden_dim)
    cap = max(_LANE, min(32768, (cap // _LANE) * _LANE))
    if B <= 512:
        # Tiny batch: one tile, no padding (block dims equal the full array dims).
        return B, 1, B
    B_lane = _round_up(B, _LANE)
    n_tiles = max(pl.cdiv(B_lane, cap), 2)        # >= 2 tiles -> v7x megacore sharding
    tile = _round_up(pl.cdiv(B_lane, n_tiles), _LANE)
    grid_n = pl.cdiv(B, tile)
    return tile, grid_n, tile * grid_n


def _vmem_limit_bytes(tile_b, input_dim, hidden_dim, mxu_itemsize, weight_buffers):
    """Per-tile footprint with (8,128) padding accounted for, plus headroom."""
    hp = _round_up(hidden_dim, _SUBLANE)
    x_tile = tile_b * _round_up(input_dim, _LANE) * 4
    out_tile = _SUBLANE * tile_b * 4
    w_bytes = (hp * _round_up(input_dim, _LANE)
               + 4 * hp * _round_up(hidden_dim, _LANE)
               + _SUBLANE * _round_up(hidden_dim, _LANE)) * mxu_itemsize
    b_bytes = 5 * hp * _LANE * 4 + _SUBLANE * _LANE * 4    # [5,hidden,1] lane-pads to 128
    act_bytes = 6 * hp * tile_b * 4
    est = 2 * (x_tile + out_tile) + weight_buffers * (w_bytes + b_bytes) + act_bytes
    return int(min(max(est + est // 4 + (2 << 20), 8 << 20), 48 << 20))


# ---------------------------------------------------------------------------
# Forward wrapper
# ---------------------------------------------------------------------------
def discriminator_forward(x, params, *, tile_b=None, mxu_dtype=jnp.bfloat16,
                          act_dtype=None, single_buffer_weights=True):
    """x: [B, input_dim] float32.  Returns [B] float32 (== fc_out(h).view(-1))."""
    packed = pack_params(params, mxu_dtype) if isinstance(params, dict) else params
    hidden_dim, input_dim = packed[0].shape
    B = x.shape[0]
    assert x.shape[1] == input_dim
    if act_dtype is None:
        act_dtype = _default_act_dtype()

    tile_b, grid_n, B_pad = _choose_tiling(B, input_dim, hidden_dim, tile_b)
    xp = jnp.pad(x, ((0, B_pad - B), (0, 0))) if B_pad != B else x

    kernel = functools.partial(_discriminator_kernel, act_dtype=act_dtype)

    # Advisory cost model: HBM traffic dominated by x (tiny matmuls).
    flops = 2 * B_pad * (input_dim * hidden_dim + 4 * hidden_dim * hidden_dim + hidden_dim)
    bytes_accessed = (B_pad * input_dim * 4 + B_pad * 4
                      + sum(int(a.size) * a.dtype.itemsize for a in packed))
    cost = pl.CostEstimate(flops=int(flops), transcendentals=0,
                           bytes_accessed=int(bytes_accessed))

    const_shapes = (
        (hidden_dim, input_dim),
        (hidden_dim, hidden_dim), (hidden_dim, hidden_dim),
        (hidden_dim, hidden_dim), (hidden_dim, hidden_dim),
        (1, hidden_dim),
        (5, hidden_dim, 1),
        (1, 1),
    )

    def run(single_buffer):
        def const_spec(shape):
            zeros = (0,) * len(shape)
            idx = lambda i, _z=zeros: _z
            if single_buffer:
                # Never-changing blocks -> no need to double-buffer their VMEM.
                return pl.BlockSpec(shape, idx, pipeline_mode=pl.Buffered(1))
            return pl.BlockSpec(shape, idx)

        in_specs = [pl.BlockSpec((tile_b, input_dim), lambda i: (i, 0))]
        in_specs += [const_spec(s) for s in const_shapes]
        out_specs = pl.BlockSpec((1, tile_b), lambda i: (0, i))   # lane-dense store

        vmem_limit = _vmem_limit_bytes(tile_b, input_dim, hidden_dim,
                                       jnp.dtype(mxu_dtype).itemsize,
                                       1 if single_buffer else 2)
        fn = pl.pallas_call(
            kernel,
            out_shape=jax.ShapeDtypeStruct((1, B_pad), jnp.float32),
            grid_spec=pltpu.PrefetchScalarGridSpec(
                num_scalar_prefetch=0,
                grid=(grid_n,),
                in_specs=in_specs,
                out_specs=out_specs,
            ),
            compiler_params=pltpu.CompilerParams(
                dimension_semantics=("parallel",),
                vmem_limit_bytes=vmem_limit,
            ),
            cost_estimate=cost,
        )
        return fn(xp, *packed)

    try:
        out = run(single_buffer_weights)
    except Exception:
        if not single_buffer_weights:
            raise
        out = run(False)   # graceful fallback: default double-buffered constant blocks

    return out.reshape(-1)[:B]


# ---------------------------------------------------------------------------
# Init + pure-JAX reference (mirrors the kernel math exactly)
# ---------------------------------------------------------------------------
def init_params(key, input_dim, hidden_dim):
    """PyTorch nn.Linear-style init.  Weights stored in native [out, in] layout."""
    def linear(key, fan_in, fan_out):
        kw, kb = jax.random.split(key)
        bound = 1.0 / math.sqrt(fan_in)
        w = jax.random.uniform(kw, (fan_out, fan_in), jnp.float32, -bound, bound)
        b = jax.random.uniform(kb, (fan_out,), jnp.float32, -bound, bound)
        return w, b

    keys = jax.random.split(key, 6)
    w_in, b_in = linear(keys[0], input_dim, hidden_dim)
    w1a, b1a = linear(keys[1], hidden_dim, hidden_dim)
    w1b, b1b = linear(keys[2], hidden_dim, hidden_dim)
    w2a, b2a = linear(keys[3], hidden_dim, hidden_dim)
    w2b, b2b = linear(keys[4], hidden_dim, hidden_dim)
    w_out, b_out = linear(keys[5], hidden_dim, 1)
    return dict(w_in=w_in, b_in=b_in,
                w1a=w1a, b1a=b1a, w1b=w1b, b1b=b1b,
                w2a=w2a, b2a=b2a, w2b=w2b, b2b=b2b,
                w_out=w_out, b_out=b_out)


def reference_forward(x, p, mxu_dtype=jnp.bfloat16, act_dtype=jnp.float32):
    """Pure-JAX reference with the same dtype schedule as the kernel."""
    def mm(name, a):
        return jnp.dot(p[name].astype(mxu_dtype), a.astype(mxu_dtype),
                       preferred_element_type=jnp.float32)

    h = (mm("w_in", x.T) + p["b_in"][:, None]).astype(act_dtype)

    def res(h, wa, ba, wb, bb):
        y = jnp.maximum(h, 0.0)
        y = (mm(wa, y) + p[ba][:, None]).astype(act_dtype)
        y = jnp.maximum(y, 0.0)
        y = (mm(wb, y) + p[bb][:, None]).astype(act_dtype)
        return y + h

    h = res(h, "w1a", "b1a", "w1b", "b1b")
    h = res(h, "w2a", "b2a", "w2b", "b2b")
    return (mm("w_out", h) + p["b_out"][:, None]).reshape(-1)


if __name__ == "__main__":
    # Shapes consistent with the module: len(FEATURES)=4 -> input_dim=12,
    # LATENT_DIM=64 -> hidden_dim=32.
    INPUT_DIM = 12
    HIDDEN_DIM = 32

    key = jax.random.PRNGKey(0)
    k_params, k_x, k_x2 = jax.random.split(key, 3)
    params = init_params(k_params, INPUT_DIM, HIDDEN_DIM)
    packed = pack_params(params)                       # one-time packing / bf16 casts

    act_dtype = _default_act_dtype()
    tol = 5e-2 if jnp.dtype(act_dtype) == jnp.dtype(jnp.bfloat16) else 1e-4

    # Test 1: tiny batch (single tile, grid = 1, no padding).
    B1 = 8
    x1 = jax.random.normal(k_x, (B1, INPUT_DIM), dtype=jnp.float32)
    out1 = jax.block_until_ready(discriminator_forward(x1, packed))
    ref1 = reference_forward(x1, params, act_dtype=act_dtype)
    assert out1.shape == (B1,)
    assert jnp.allclose(out1, ref1, atol=tol, rtol=tol), (out1, ref1)

    # Test 2: irregular batch -> zero-padded, multi-tile (>=2 grid steps),
    # lane-dense 128-multiple output blocks.
    B2 = 4099
    x2 = jax.random.normal(k_x2, (B2, INPUT_DIM), dtype=jnp.float32)
    out2 = jax.block_until_ready(discriminator_forward(x2, packed))
    ref2 = reference_forward(x2, params, act_dtype=act_dtype)
    assert out2.shape == (B2,)
    assert jnp.allclose(out2, ref2, atol=tol, rtol=tol), \
        float(jnp.max(jnp.abs(out2 - ref2)))

    print("KERNEL_OK")
</pallas_src>

<mosaic_0001>
module attributes {stable_mosaic.version = 11 : i64} {
  func.func @_discriminator_kernel(%arg0: i32, %arg1: memref<8x12xf32, #tpu.memory_space<vmem>>, %arg2: memref<32x12xbf16, #tpu.memory_space<vmem>>, %arg3: memref<32x32xbf16, #tpu.memory_space<vmem>>, %arg4: memref<32x32xbf16, #tpu.memory_space<vmem>>, %arg5: memref<32x32xbf16, #tpu.memory_space<vmem>>, %arg6: memref<32x32xbf16, #tpu.memory_space<vmem>>, %arg7: memref<1x32xbf16, #tpu.memory_space<vmem>>, %arg8: memref<5x32x1xf32, #tpu.memory_space<vmem>>, %arg9: memref<1x1xf32, #tpu.memory_space<vmem>>, %arg10: memref<1x8xf32, #tpu.memory_space<vmem>>) attributes {dimension_semantics = [#tpu.dimension_semantics<parallel>], iteration_bounds = array<i64: 1>, scalar_prefetch = 0 : i64, scratch_operands = 0 : i64, tpu.core_type = #tpu.core_type<tc>, window_params = [{transform_indices = @transform_0, window_bounds = array<i64: 8, 12>}, {pipeline_mode = #tpu.pipeline_mode<synchronous>, transform_indices = @transform_1, window_bounds = array<i64: 32, 12>}, {pipeline_mode = #tpu.pipeline_mode<synchronous>, transform_indices = @transform_2, window_bounds = array<i64: 32, 32>}, {pipeline_mode = #tpu.pipeline_mode<synchronous>, transform_indices = @transform_3, window_bounds = array<i64: 32, 32>}, {pipeline_mode = #tpu.pipeline_mode<synchronous>, transform_indices = @transform_4, window_bounds = array<i64: 32, 32>}, {pipeline_mode = #tpu.pipeline_mode<synchronous>, transform_indices = @transform_5, window_bounds = array<i64: 32, 32>}, {pipeline_mode = #tpu.pipeline_mode<synchronous>, transform_indices = @transform_6, window_bounds = array<i64: 1, 32>}, {pipeline_mode = #tpu.pipeline_mode<synchronous>, transform_indices = @transform_7, window_bounds = array<i64: 5, 32, 1>}, {pipeline_mode = #tpu.pipeline_mode<synchronous>, transform_indices = @transform_8, window_bounds = array<i64: 1, 1>}, {transform_indices = @transform_9, window_bounds = array<i64: 1, 8>}]} {
    %c0 = arith.constant 0 : index
    %c0_0 = arith.constant 0 : index
    %0 = vector.load %arg2[%c0, %c0_0] : memref<32x12xbf16, #tpu.memory_space<vmem>>, vector<32x12xbf16>
    %c0_1 = arith.constant 0 : index
    %c0_2 = arith.constant 0 : index
    %1 = vector.load %arg1[%c0_1, %c0_2] : memref<8x12xf32, #tpu.memory_space<vmem>>, vector<8x12xf32>
    %2 = arith.truncf %1 : vector<8x12xf32> to vector<8x12xbf16>
    %cst = arith.constant dense<0.000000e+00> : vector<32x8xf32>
    %3 = tpu.matmul %0, %2, %cst {dimension_numbers = #tpu.dot_dimension_numbers<[1], [1], [0], [0], [0, 0, 1, 0], [], []>} : vector<32x12xbf16>, vector<8x12xbf16>, vector<32x8xf32> -> vector<32x8xf32>
    %c0_3 = arith.constant 0 : index
    %c0_4 = arith.constant 0 : index
    %c0_5 = arith.constant 0 : index
    %4 = vector.load %arg8[%c0_3, %c0_4, %c0_5] : memref<5x32x1xf32, #tpu.memory_space<vmem>>, vector<1x32x1xf32>
    %5 = vector.shape_cast %4 : vector<1x32x1xf32> to vector<32x1xf32>
    %6 = vector.broadcast %5 : vector<32x1xf32> to vector<32x8xf32>
    %7 = arith.addf %3, %6 : vector<32x8xf32>
    %cst_6 = arith.constant 0.000000e+00 : f32
    %8 = vector.broadcast %cst_6 : f32 to vector<32x8xf32>
    %9 = arith.maximumf %7, %8 : vector<32x8xf32>
    %c0_7 = arith.constant 0 : index
    %c0_8 = arith.constant 0 : index
    %10 = vector.load %arg3[%c0_7, %c0_8] : memref<32x32xbf16, #tpu.memory_space<vmem>>, vector<32x32xbf16>
    %11 = arith.truncf %9 : vector<32x8xf32> to vector<32x8xbf16>
    %cst_9 = arith.constant dense<0.000000e+00> : vector<32x8xf32>
    %12 = tpu.matmul %10, %11, %cst_9 {dimension_numbers = #tpu.dot_dimension_numbers<[1], [0], [0], [1], [0, 0, 1, 1], [], []>} : vector<32x32xbf16>, vector<32x8xbf16>, vector<32x8xf32> -> vector<32x8xf32>
    %c1 = arith.constant 1 : index
    %c0_10 = arith.constant 0 : index
    %c0_11 = arith.constant 0 : index
    %13 = vector.load %arg8[%c1, %c0_10, %c0_11] : memref<5x32x1xf32, #tpu.memory_space<vmem>>, vector<1x32x1xf32>
    %14 = vector.shape_cast %13 : vector<1x32x1xf32> to vector<32x1xf32>
    %15 = vector.broadcast %14 : vector<32x1xf32> to vector<32x8xf32>
    %16 = arith.addf %12, %15 : vector<32x8xf32>
    %cst_12 = arith.constant 0.000000e+00 : f32
    %17 = vector.broadcast %cst_12 : f32 to vector<32x8xf32>
    %18 = arith.maximumf %16, %17 : vector<32x8xf32>
    %c0_13 = arith.constant 0 : index
    %c0_14 = arith.constant 0 : index
    %19 = vector.load %arg4[%c0_13, %c0_14] : memref<32x32xbf16, #tpu.memory_space<vmem>>, vector<32x32xbf16>
    %20 = arith.truncf %18 : vector<32x8xf32> to vector<32x8xbf16>
    %cst_15 = arith.constant dense<0.000000e+00> : vector<32x8xf32>
    %21 = tpu.matmul %19, %20, %cst_15 {dimension_numbers = #tpu.dot_dimension_numbers<[1], [0], [0], [1], [0, 0, 1, 1], [], []>} : vector<32x32xbf16>, vector<32x8xbf16>, vector<32x8xf32> -> vector<32x8xf32>
    %c2 = arith.constant 2 : index
    %c0_16 = arith.constant 0 : index
    %c0_17 = arith.constant 0 : index
    %22 = vector.load %arg8[%c2, %c0_16, %c0_17] : memref<5x32x1xf32, #tpu.memory_space<vmem>>, vector<1x32x1xf32>
    %23 = vector.shape_cast %22 : vector<1x32x1xf32> to vector<32x1xf32>
    %24 = vector.broadcast %23 : vector<32x1xf32> to vector<32x8xf32>
    %25 = arith.addf %21, %24 : vector<32x8xf32>
    %26 = arith.addf %25, %7 : vector<32x8xf32>
    %cst_18 = arith.constant 0.000000e+00 : f32
    %27 = vector.broadcast %cst_18 : f32 to vector<32x8xf32>
    %28 = arith.maximumf %26, %27 : vector<32x8xf32>
    %c0_19 = arith.constant 0 : index
    %c0_20 = arith.constant 0 : index
    %29 = vector.load %arg5[%c0_19, %c0_20] : memref<32x32xbf16, #tpu.memory_space<vmem>>, vector<32x32xbf16>
    %30 = arith.truncf %28 : vector<32x8xf32> to vector<32x8xbf16>
    %cst_21 = arith.constant dense<0.000000e+00> : vector<32x8xf32>
    %31 = tpu.matmul %29, %30, %cst_21 {dimension_numbers = #tpu.dot_dimension_numbers<[1], [0], [0], [1], [0, 0, 1, 1], [], []>} : vector<32x32xbf16>, vector<32x8xbf16>, vector<32x8xf32> -> vector<32x8xf32>
    %c3 = arith.constant 3 : index
    %c0_22 = arith.constant 0 : index
    %c0_23 = arith.constant 0 : index
    %32 = vector.load %arg8[%c3, %c0_22, %c0_23] : memref<5x32x1xf32, #tpu.memory_space<vmem>>, vector<1x32x1xf32>
    %33 = vector.shape_cast %32 : vector<1x32x1xf32> to vector<32x1xf32>
    %34 = vector.broadcast %33 : vector<32x1xf32> to vector<32x8xf32>
    %35 = arith.addf %31, %34 : vector<32x8xf32>
    %cst_24 = arith.constant 0.000000e+00 : f32
    %36 = vector.broadcast %cst_24 : f32 to vector<32x8xf32>
    %37 = arith.maximumf %35, %36 : vector<32x8xf32>
    %c0_25 = arith.constant 0 : index
    %c0_26 = arith.constant 0 : index
    %38 = vector.load %arg6[%c0_25, %c0_26] : memref<32x32xbf16, #tpu.memory_space<vmem>>, vector<32x32xbf16>
    %39 = arith.truncf %37 : vector<32x8xf32> to vector<32x8xbf16>
    %cst_27 = arith.constant dense<0.000000e+00> : vector<32x8xf32>
    %40 = tpu.matmul %38, %39, %cst_27 {dimension_numbers = #tpu.dot_dimension_numbers<[1], [0], [0], [1], [0, 0, 1, 1], [], []>} : vector<32x32xbf16>, vector<32x8xbf16>, vector<32x8xf32> -> vector<32x8xf32>
    %c4 = arith.constant 4 : index
    %c0_28 = arith.constant 0 : index
    %c0_29 = arith.constant 0 : index
    %41 = vector.load %arg8[%c4, %c0_28, %c0_29] : memref<5x32x1xf32, #tpu.memory_space<vmem>>, vector<1x32x1xf32>
    %42 = vector.shape_cast %41 : vector<1x32x1xf32> to vector<32x1xf32>
    %43 = vector.broadcast %42 : vector<32x1xf32> to vector<32x8xf32>
    %44 = arith.addf %40, %43 : vector<32x8xf32>
    %45 = arith.addf %44, %26 : vector<32x8xf32>
    %c0_30 = arith.constant 0 : index
    %c0_31 = arith.constant 0 : index
    %46 = vector.load %arg7[%c0_30, %c0_31] : memref<1x32xbf16, #tpu.memory_space<vmem>>, vector<1x32xbf16>
    %47 = arith.truncf %45 : vector<32x8xf32> to vector<32x8xbf16>
    %cst_32 = arith.constant dense<0.000000e+00> : vector<1x8xf32>
    %48 = tpu.matmul %46, %47, %cst_32 {dimension_numbers = #tpu.dot_dimension_numbers<[1], [0], [0], [1], [0, 0, 1, 1], [], []>} : vector<1x32xbf16>, vector<32x8xbf16>, vector<1x8xf32> -> vector<1x8xf32>
    %c0_33 = arith.constant 0 : index
    %c0_34 = arith.constant 0 : index
    %49 = vector.load %arg9[%c0_33, %c0_34] : memref<1x1xf32, #tpu.memory_space<vmem>>, vector<1x1xf32>
    %50 = vector.broadcast %49 : vector<1x1xf32> to vector<1x8xf32>
    %51 = arith.addf %48, %50 : vector<1x8xf32>
    %c0_35 = arith.constant 0 : index
    %c0_36 = arith.constant 0 : index
    %52 = vector.load %arg10[%c0_35, %c0_36] : memref<1x8xf32, #tpu.memory_space<vmem>>, vector<1x8xf32>
    tpu.vector_store %arg10[%c0_35, %c0_36], %51 {strides = array<i32>} : memref<1x8xf32, #tpu.memory_space<vmem>>, vector<1x8xf32>,
    return
  }
  func.func @transform_0(%arg0: i32) -> (i32, i32) {
    %c0_i32 = arith.constant 0 : i32
    %c0_i32_0 = arith.constant 0 : i32
    return %arg0, %c0_i32 : i32, i32
  }
  func.func @transform_1(%arg0: i32) -> (i32, i32) {
    %c0_i32 = arith.constant 0 : i32
    %c0_i32_0 = arith.constant 0 : i32
    %c0_i32_1 = arith.constant 0 : i32
    return %c0_i32, %c0_i32_0 : i32, i32
  }
  func.func @transform_2(%arg0: i32) -> (i32, i32) {
    %c0_i32 = arith.constant 0 : i32
    %c0_i32_0 = arith.constant 0 : i32
    %c0_i32_1 = arith.constant 0 : i32
    return %c0_i32, %c0_i32_0 : i32, i32
  }
  func.func @transform_3(%arg0: i32) -> (i32, i32) {
    %c0_i32 = arith.constant 0 : i32
    %c0_i32_0 = arith.constant 0 : i32
    %c0_i32_1 = arith.constant 0 : i32
    return %c0_i32, %c0_i32_0 : i32, i32
  }
  func.func @transform_4(%arg0: i32) -> (i32, i32) {
    %c0_i32 = arith.constant 0 : i32
    %c0_i32_0 = arith.constant 0 : i32
    %c0_i32_1 = arith.constant 0 : i32
    return %c0_i32, %c0_i32_0 : i32, i32
  }
  func.func @transform_5(%arg0: i32) -> (i32, i32) {
    %c0_i32 = arith.constant 0 : i32
    %c0_i32_0 = arith.constant 0 : i32
    %c0_i32_1 = arith.constant 0 : i32
    return %c0_i32, %c0_i32_0 : i32, i32
  }
  func.func @transform_6(%arg0: i32) -> (i32, i32) {
    %c0_i32 = arith.constant 0 : i32
    %c0_i32_0 = arith.constant 0 : i32
    %c0_i32_1 = arith.constant 0 : i32
    return %c0_i32, %c0_i32_0 : i32, i32
  }
  func.func @transform_7(%arg0: i32) -> (i32, i32, i32) {
    %c0_i32 = arith.constant 0 : i32
    %c0_i32_0 = arith.constant 0 : i32
    %c0_i32_1 = arith.constant 0 : i32
    %c0_i32_2 = arith.constant 0 : i32
    return %c0_i32, %c0_i32_0, %c0_i32_1 : i32, i32, i32
  }
  func.func @transform_8(%arg0: i32) -> (i32, i32) {
    %c0_i32 = arith.constant 0 : i32
    %c0_i32_0 = arith.constant 0 : i32
    %c0_i32_1 = arith.constant 0 : i32
    return %c0_i32, %c0_i32_0 : i32, i32
  }
  func.func @transform_9(%arg0: i32) -> (i32, i32) {
    %c0_i32 = arith.constant 0 : i32
    %c0_i32_0 = arith.constant 0 : i32
    return %c0_i32, %arg0 : i32, i32
  }
}

module attributes {stable_mosaic.version = 11 : i64} {
  func.func @_discriminator_kernel(%arg0: i32, %arg1: memref<8x12xf32, #tpu.memory_space<vmem>>, %arg2: memref<32x12xbf16, #tpu.memory_space<vmem>>, %arg3: memref<32x32xbf16, #tpu.memory_space<vmem>>, %arg4: memref<32x32xbf16, #tpu.memory_space<vmem>>, %arg5: memref<32x32xbf16, #tpu.memory_space<vmem>>, %arg6: memref<32x32xbf16, #tpu.memory_space<vmem>>, %arg7: memref<1x32xbf16, #tpu.memory_space<vmem>>, %arg8: memref<5x32x1xf32, #tpu.memory_space<vmem>>, %arg9: memref<1x1xf32, #tpu.memory_space<vmem>>, %arg10: memref<1x8xf32, #tpu.memory_space<vmem>>) attributes {dimension_semantics = [#tpu.dimension_semantics<parallel>], iteration_bounds = array<i64: 1>, scalar_prefetch = 0 : i64, scratch_operands = 0 : i64, tpu.core_type = #tpu.core_type<tc>, window_params = [{transform_indices = @transform_0, window_bounds = array<i64: 8, 12>}, {pipeline_mode = #tpu.pipeline_mode<synchronous>, transform_indices = @transform_1, window_bounds = array<i64: 32, 12>}, {pipeline_mode = #tpu.pipeline_mode<synchronous>, transform_indices = @transform_2, window_bounds = array<i64: 32, 32>}, {pipeline_mode = #tpu.pipeline_mode<synchronous>, transform_indices = @transform_3, window_bounds = array<i64: 32, 32>}, {pipeline_mode = #tpu.pipeline_mode<synchronous>, transform_indices = @transform_4, window_bounds = array<i64: 32, 32>}, {pipeline_mode = #tpu.pipeline_mode<synchronous>, transform_indices = @transform_5, window_bounds = array<i64: 32, 32>}, {pipeline_mode = #tpu.pipeline_mode<synchronous>, transform_indices = @transform_6, window_bounds = array<i64: 1, 32>}, {pipeline_mode = #tpu.pipeline_mode<synchronous>, transform_indices = @transform_7, window_bounds = array<i64: 5, 32, 1>}, {pipeline_mode = #tpu.pipeline_mode<synchronous>, transform_indices = @transform_8, window_bounds = array<i64: 1, 1>}, {transform_indices = @transform_9, window_bounds = array<i64: 1, 8>}]} {
    %c0 = arith.constant 0 : index
    %c0_0 = arith.constant 0 : index
    %0 = vector.load %arg2[%c0, %c0_0] : memref<32x12xbf16, #tpu.memory_space<vmem>>, vector<32x12xbf16>
    %c0_1 = arith.constant 0 : index
    %c0_2 = arith.constant 0 : index
    %1 = vector.load %arg1[%c0_1, %c0_2] : memref<8x12xf32, #tpu.memory_space<vmem>>, vector<8x12xf32>
    %2 = arith.truncf %1 : vector<8x12xf32> to vector<8x12xbf16>
    %cst = arith.constant dense<0.000000e+00> : vector<32x8xf32>
    %3 = tpu.matmul %0, %2, %cst {dimension_numbers = #tpu.dot_dimension_numbers<[1], [1], [0], [0], [0, 0, 1, 0], [], []>} : vector<32x12xbf16>, vector<8x12xbf16>, vector<32x8xf32> -> vector<32x8xf32>
    %c0_3 = arith.constant 0 : index
    %c0_4 = arith.constant 0 : index
    %c0_5 = arith.constant 0 : index
    %4 = vector.load %arg8[%c0_3, %c0_4, %c0_5] : memref<5x32x1xf32, #tpu.memory_space<vmem>>, vector<1x32x1xf32>
    %5 = vector.shape_cast %4 : vector<1x32x1xf32> to vector<32x1xf32>
    %6 = vector.broadcast %5 : vector<32x1xf32> to vector<32x8xf32>
    %7 = arith.addf %3, %6 : vector<32x8xf32>
    %cst_6 = arith.constant 0.000000e+00 : f32
    %8 = vector.broadcast %cst_6 : f32 to vector<32x8xf32>
    %9 = arith.maximumf %7, %8 : vector<32x8xf32>
    %c0_7 = arith.constant 0 : index
    %c0_8 = arith.constant 0 : index
    %10 = vector.load %arg3[%c0_7, %c0_8] : memref<32x32xbf16, #tpu.memory_space<vmem>>, vector<32x32xbf16>
    %11 = arith.truncf %9 : vector<32x8xf32> to vector<32x8xbf16>
    %cst_9 = arith.constant dense<0.000000e+00> : vector<32x8xf32>
    %12 = tpu.matmul %10, %11, %cst_9 {dimension_numbers = #tpu.dot_dimension_numbers<[1], [0], [0], [1], [0, 0, 1, 1], [], []>} : vector<32x32xbf16>, vector<32x8xbf16>, vector<32x8xf32> -> vector<32x8xf32>
    %c1 = arith.constant 1 : index
    %c0_10 = arith.constant 0 : index
    %c0_11 = arith.constant 0 : index
    %13 = vector.load %arg8[%c1, %c0_10, %c0_11] : memref<5x32x1xf32, #tpu.memory_space<vmem>>, vector<1x32x1xf32>
    %14 = vector.shape_cast %13 : vector<1x32x1xf32> to vector<32x1xf32>
    %15 = vector.broadcast %14 : vector<32x1xf32> to vector<32x8xf32>
    %16 = arith.addf %12, %15 : vector<32x8xf32>
    %cst_12 = arith.constant 0.000000e+00 : f32
    %17 = vector.broadcast %cst_12 : f32 to vector<32x8xf32>
    %18 = arith.maximumf %16, %17 : vector<32x8xf32>
    %c0_13 = arith.constant 0 : index
    %c0_14 = arith.constant 0 : index
    %19 = vector.load %arg4[%c0_13, %c0_14] : memref<32x32xbf16, #tpu.memory_space<vmem>>, vector<32x32xbf16>
    %20 = arith.truncf %18 : vector<32x8xf32> to vector<32x8xbf16>
    %cst_15 = arith.constant dense<0.000000e+00> : vector<32x8xf32>
    %21 = tpu.matmul %19, %20, %cst_15 {dimension_numbers = #tpu.dot_dimension_numbers<[1], [0], [0], [1], [0, 0, 1, 1], [], []>} : vector<32x32xbf16>, vector<32x8xbf16>, vector<32x8xf32> -> vector<32x8xf32>
    %c2 = arith.constant 2 : index
    %c0_16 = arith.constant 0 : index
    %c0_17 = arith.constant 0 : index
    %22 = vector.load %arg8[%c2, %c0_16, %c0_17] : memref<5x32x1xf32, #tpu.memory_space<vmem>>, vector<1x32x1xf32>
    %23 = vector.shape_cast %22 : vector<1x32x1xf32> to vector<32x1xf32>
    %24 = vector.broadcast %23 : vector<32x1xf32> to vector<32x8xf32>
    %25 = arith.addf %21, %24 : vector<32x8xf32>
    %26 = arith.addf %25, %7 : vector<32x8xf32>
    %cst_18 = arith.constant 0.000000e+00 : f32
    %27 = vector.broadcast %cst_18 : f32 to vector<32x8xf32>
    %28 = arith.maximumf %26, %27 : vector<32x8xf32>
    %c0_19 = arith.constant 0 : index
    %c0_20 = arith.constant 0 : index
    %29 = vector.load %arg5[%c0_19, %c0_20] : memref<32x32xbf16, #tpu.memory_space<vmem>>, vector<32x32xbf16>
    %30 = arith.truncf %28 : vector<32x8xf32> to vector<32x8xbf16>
    %cst_21 = arith.constant dense<0.000000e+00> : vector<32x8xf32>
    %31 = tpu.matmul %29, %30, %cst_21 {dimension_numbers = #tpu.dot_dimension_numbers<[1], [0], [0], [1], [0, 0, 1, 1], [], []>} : vector<32x32xbf16>, vector<32x8xbf16>, vector<32x8xf32> -> vector<32x8xf32>
    %c3 = arith.constant 3 : index
    %c0_22 = arith.constant 0 : index
    %c0_23 = arith.constant 0 : index
    %32 = vector.load %arg8[%c3, %c0_22, %c0_23] : memref<5x32x1xf32, #tpu.memory_space<vmem>>, vector<1x32x1xf32>
    %33 = vector.shape_cast %32 : vector<1x32x1xf32> to vector<32x1xf32>
    %34 = vector.broadcast %33 : vector<32x1xf32> to vector<32x8xf32>
    %35 = arith.addf %31, %34 : vector<32x8xf32>
    %cst_24 = arith.constant 0.000000e+00 : f32
    %36 = vector.broadcast %cst_24 : f32 to vector<32x8xf32>
    %37 = arith.maximumf %35, %36 : vector<32x8xf32>
    %c0_25 = arith.constant 0 : index
    %c0_26 = arith.constant 0 : index
    %38 = vector.load %arg6[%c0_25, %c0_26] : memref<32x32xbf16, #tpu.memory_space<vmem>>, vector<32x32xbf16>
    %39 = arith.truncf %37 : vector<32x8xf32> to vector<32x8xbf16>
    %cst_27 = arith.constant dense<0.000000e+00> : vector<32x8xf32>
    %40 = tpu.matmul %38, %39, %cst_27 {dimension_numbers = #tpu.dot_dimension_numbers<[1], [0], [0], [1], [0, 0, 1, 1], [], []>} : vector<32x32xbf16>, vector<32x8xbf16>, vector<32x8xf32> -> vector<32x8xf32>
    %c4 = arith.constant 4 : index
    %c0_28 = arith.constant 0 : index
    %c0_29 = arith.constant 0 : index
    %41 = vector.load %arg8[%c4, %c0_28, %c0_29] : memref<5x32x1xf32, #tpu.memory_space<vmem>>, vector<1x32x1xf32>
    %42 = vector.shape_cast %41 : vector<1x32x1xf32> to vector<32x1xf32>
    %43 = vector.broadcast %42 : vector<32x1xf32> to vector<32x8xf32>
    %44 = arith.addf %40, %43 : vector<32x8xf32>
    %45 = arith.addf %44, %26 : vector<32x8xf32>
    %c0_30 = arith.constant 0 : index
    %c0_31 = arith.constant 0 : index
    %46 = vector.load %arg7[%c0_30, %c0_31] : memref<1x32xbf16, #tpu.memory_space<vmem>>, vector<1x32xbf16>
    %47 = arith.truncf %45 : vector<32x8xf32> to vector<32x8xbf16>
    %cst_32 = arith.constant dense<0.000000e+00> : vector<1x8xf32>
    %48 = tpu.matmul %46, %47, %cst_32 {dimension_numbers = #tpu.dot_dimension_numbers<[1], [0], [0], [1], [0, 0, 1, 1], [], []>} : vector<1x32xbf16>, vector<32x8xbf16>, vector<1x8xf32> -> vector<1x8xf32>
    %c0_33 = arith.constant 0 : index
    %c0_34 = arith.constant 0 : index
    %49 = vector.load %arg9[%c0_33, %c0_34] : memref<1x1xf32, #tpu.memory_space<vmem>>, vector<1x1xf32>
    %50 = vector.broadcast %49 : vector<1x1xf32> to vector<1x8xf32>
    %51 = arith.addf %48, %50 : vector<1x8xf32>
    %c0_35 = arith.constant 0 : index
    %c0_36 = arith.constant 0 : index
    %52 = vector.load %arg10[%c0_35, %c0_36] : memref<1x8xf32, #tpu.memory_space<vmem>>, vector<1x8xf32>
    tpu.vector_store %arg10[%c0_35, %c0_36], %51 {strides = array<i32>} : memref<1x8xf32, #tpu.memory_space<vmem>>, vector<1x8xf32>,
    return
  }
  func.func @transform_0(%arg0: i32) -> (i32, i32) {
    %c0_i32 = arith.constant 0 : i32
    %c0_i32_0 = arith.constant 0 : i32
    return %arg0, %c0_i32 : i32, i32
  }
  func.func @transform_1(%arg0: i32) -> (i32, i32) {
    %c0_i32 = arith.constant 0 : i32
    %c0_i32_0 = arith.constant 0 : i32
    %c0_i32_1 = arith.constant 0 : i32
    return %c0_i32, %c0_i32_0 : i32, i32
  }
  func.func @transform_2(%arg0: i32) -> (i32, i32) {
    %c0_i32 = arith.constant 0 : i32
    %c0_i32_0 = arith.constant 0 : i32
    %c0_i32_1 = arith.constant 0 : i32
    return %c0_i32, %c0_i32_0 : i32, i32
  }
  func.func @transform_3(%arg0: i32) -> (i32, i32) {
    %c0_i32 = arith.constant 0 : i32
    %c0_i32_0 = arith.constant 0 : i32
    %c0_i32_1 = arith.constant 0 : i32
    return %c0_i32, %c0_i32_0 : i32, i32
  }
  func.func @transform_4(%arg0: i32) -> (i32, i32) {
    %c0_i32 = arith.constant 0 : i32
    %c0_i32_0 = arith.constant 0 : i32
    %c0_i32_1 = arith.constant 0 : i32
    return %c0_i32, %c0_i32_0 : i32, i32
  }
  func.func @transform_5(%arg0: i32) -> (i32, i32) {
    %c0_i32 = arith.constant 0 : i32
    %c0_i32_0 = arith.constant 0 : i32
    %c0_i32_1 = arith.constant 0 : i32
    return %c0_i32, %c0_i32_0 : i32, i32
  }
  func.func @transform_6(%arg0: i32) -> (i32, i32) {
    %c0_i32 = arith.constant 0 : i32
    %c0_i32_0 = arith.constant 0 : i32
    %c0_i32_1 = arith.constant 0 : i32
    return %c0_i32, %c0_i32_0 : i32, i32
  }
  func.func @transform_7(%arg0: i32) -> (i32, i32, i32) {
    %c0_i32 = arith.constant 0 : i32
    %c0_i32_0 = arith.constant 0 : i32
    %c0_i32_1 = arith.constant 0 : i32
    %c0_i32_2 = arith.constant 0 : i32
    return %c0_i32, %c0_i32_0, %c0_i32_1 : i32, i32, i32
  }
  func.func @transform_8(%arg0: i32) -> (i32, i32) {
    %c0_i32 = arith.constant 0 : i32
    %c0_i32_0 = arith.constant 0 : i32
    %c0_i32_1 = arith.constant 0 : i32
    return %c0_i32, %c0_i32_0 : i32, i32
  }
  func.func @transform_9(%arg0: i32) -> (i32, i32) {
    %c0_i32 = arith.constant 0 : i32
    %c0_i32_0 = arith.constant 0 : i32
    return %c0_i32, %arg0 : i32, i32
  }
}

</mosaic_0001>

<llo_original>
// kernel: tpu_custom_call.1
$region0: #{tpu_custom_call.1}
  #allocation0 [shape = 'u32[]', space=smem, size = 0x4, offset = 0x4, fixed_abs, tag = 'smem constant byte address 0x4 - core index']
  #allocation1 [shape = 'u32[72,128]{1,0:T(1,128)}', space=vmem, size = 0x9000, scoped, tag = 'internal scratch']
  #allocation2 [shape = 'f32[1,1]{1,0:T(1,128)S(1)}', space=vmem, size = 0x200, scoped, tag = 'scoped memory for tpu_custom_call.1']
  %s0 = inlined_call_operand.vmem [shape: f32[8,12], index: 0, kind: input, shape index: {}]
  %s1 = inlined_call_operand.vmem [shape: bf16[32,12], index: 1, kind: input, shape index: {}]
  %s2 = inlined_call_operand.vmem [shape: bf16[32,32], index: 2, kind: input, shape index: {}]
  %s3 = inlined_call_operand.vmem [shape: bf16[32,32], index: 3, kind: input, shape index: {}]
  %s4 = inlined_call_operand.vmem [shape: bf16[32,32], index: 4, kind: input, shape index: {}]
  %s5 = inlined_call_operand.vmem [shape: bf16[32,32], index: 5, kind: input, shape index: {}]
  %s6 = inlined_call_operand.vmem [shape: bf16[1,32], index: 6, kind: input, shape index: {}]
  %s7 = inlined_call_operand.vmem [shape: f32[5,32,1], index: 7, kind: input, shape index: {}]
  %s8 = inlined_call_operand.<no memory space> [shape: f32[1,1], index: 8, kind: input, shape index: {}]
  %s9 = inlined_call_operand.hbm [shape: f32[1,8], index: 9, kind: output, shape index: {}]
  %s10 = sld [smem:[#allocation0]]
  $region46: #{tpu_custom_call.1} parent=0
    _
  %s12 = ssub.s32 1, %s10
  %s13 = scalar_select 0, %s12, %s10
  %v14 = vstv %s8
  %15 = vst [vmem:[#allocation2] sm:$0x1] %v14
  $region1: #{tpu_custom_call.1} parent=0
    #allocation3 [shape = 'u8[512]{0}', space=vmem, size = 0x400, scoped, tag = 'output window, operand 0, single buffered']
    #allocation4 [shape = 's32[1]{0}', space=sflag, size = 0x4, scoped, tag = 'scoped memory for tpu_custom_call.1']
    %16 = vsyncpa [#allocation4], 0
    // Predicated region
    $region2: #{tpu_custom_call.1} parent=1 // pred_check
      _
    $region3: #{tpu_custom_call.1} parent=1 // pred_check_branch
      %18 = sbr.rel (0) target = $region5
    $region4: #{tpu_custom_call.1} parent=1 // pred_region
      _
    $region5: #{tpu_custom_call.1} parent=1 // pred_fallthru
      _
    // Predicated region
    $region6: #{tpu_custom_call.1} parent=1 // pred_check
      _
    $region7: #{tpu_custom_call.1} parent=1 // pred_check_branch
      %20 = sbr.rel (0) target = $region9
    $region8: #{tpu_custom_call.1} parent=1 // pred_region
      _
    $region9: #{tpu_custom_call.1} parent=1 // pred_fallthru
      _
    // Predicated region
    $region10: #{tpu_custom_call.1} parent=1 // pred_check
      _
    $region11: #{tpu_custom_call.1} parent=1 // pred_check_branch
      %22 = sbr.rel (0) target = $region13
    $region12: #{tpu_custom_call.1} parent=1 // pred_region
      _
    $region13: #{tpu_custom_call.1} parent=1 // pred_fallthru
      _
    // Predicated region
    $region14: #{tpu_custom_call.1} parent=1 // pred_check
      _
    $region15: #{tpu_custom_call.1} parent=1 // pred_check_branch
      %24 = sbr.rel (0) target = $region17
    $region16: #{tpu_custom_call.1} parent=1 // pred_region
      _
    $region17: #{tpu_custom_call.1} parent=1 // pred_fallthru
      _
    // Predicated region
    $region18: #{tpu_custom_call.1} parent=1 // pred_check
      _
    $region19: #{tpu_custom_call.1} parent=1 // pred_check_branch
      %26 = sbr.rel (0) target = $region21
    $region20: #{tpu_custom_call.1} parent=1 // pred_region
      _
    $region21: #{tpu_custom_call.1} parent=1 // pred_fallthru
      _
    // Predicated region
    $region22: #{tpu_custom_call.1} parent=1 // pred_check
      _
    $region23: #{tpu_custom_call.1} parent=1 // pred_check_branch
      %28 = sbr.rel (0) target = $region25
    $region24: #{tpu_custom_call.1} parent=1 // pred_region
      _
    $region25: #{tpu_custom_call.1} parent=1 // pred_fallthru
      _
    // Predicated region
    $region26: #{tpu_custom_call.1} parent=1 // pred_check
      _
    $region27: #{tpu_custom_call.1} parent=1 // pred_check_branch
      %30 = sbr.rel (0) target = $region29
    $region28: #{tpu_custom_call.1} parent=1 // pred_region
      _
    $region29: #{tpu_custom_call.1} parent=1 // pred_fallthru
      _
    // Predicated region
    $region30: #{tpu_custom_call.1} parent=1 // pred_check
      _
    $region31: #{tpu_custom_call.1} parent=1 // pred_check_branch
      %32 = sbr.rel (0) target = $region33
    $region32: #{tpu_custom_call.1} parent=1 // pred_region
      _
    $region33: #{tpu_custom_call.1} parent=1 // pred_fallthru
      _
    // Predicated region
    $region34: #{tpu_custom_call.1} parent=1 // pred_check
      _
    $region35: #{tpu_custom_call.1} parent=1 // pred_check_branch
      %34 = sbr.rel (0) target = $region37
    $region36: #{tpu_custom_call.1} parent=1 // pred_region
      _
    $region37: #{tpu_custom_call.1} parent=1 // pred_fallthru
      _
    %v36 = vld [vmem:[%s1] sm:$0xf]
    %v37 = vld [vmem:[%s1 + $0x4] sm:$0xf]
    %v38 = vld [vmem:[%s1 + $0x8] sm:$0xf]
    %v39 = vld [vmem:[%s1 + $0xc] sm:$0xf]
    %v40 = vld [vmem:[%s0] sm:$0xff]
    %v41 = vpack.c.bf16 %v40, %v40
    %v42 = vld [vmem:[%s7] sm:$0xff]
    %v43 = vld [vmem:[%s7 + $0x8] sm:$0xff]
    %v44 = vld [vmem:[%s7 + $0x10] sm:$0xff]
    %v45 = vld [vmem:[%s7 + $0x18] sm:$0xff]
    %47 = vset.pattern.permute.xlu0 0
    %48 = vperm.xlu0 %47, %v42
    %v49 = vpop.permute.xlu0 %48
    %52 = vset.pattern.permute.xlu0 0
    %53 = vperm.xlu0 %52, %v43
    %v54 = vpop.permute.xlu0 %53
    %57 = vset.pattern.permute.xlu0 0
    %58 = vperm.xlu0 %57, %v44
    %v59 = vpop.permute.xlu0 %58
    %62 = vset.pattern.permute.xlu0 0
    %63 = vperm.xlu0 %62, %v45
    %v64 = vpop.permute.xlu0 %63
    %v70 = vunpack.c.l.b16 %v36
    %v71 = vunpack.c.l.b16 %v37
    %v72 = vunpack.c.l.b16 %v38
    %v73 = vunpack.c.l.b16 %v39
    %v74 = vpack.c.b16 %v71, %v70
    %v75 = vpack.c.b16 %v73, %v72
    %vm76 = vcmask 97280
    %v78 = vsel %vm76, %v74, 0
    %v81 = vsel %vm76, %v75, 0
    %v84 = vsel %vm76, %v41, 0
    %86 = vmatpush.bf16.xpose.msra.mxu0 0
    %87 = vmatpush.bf16.xpose.msra.mxu0 0
    %88 = vmatpush.bf16.xpose.msra.mxu0 0
    %89 = vmatpush.bf16.xpose.msra.mxu0 0
    %90 = vmatpush.bf16.xpose.msra.mxu0 0
    %91 = vmatpush.bf16.xpose.msra.mxu0 0
    %92 = vmatpush.bf16.xpose.msra.mxu0 0
    %93 = vmatpush.bf16.xpose.msra.mxu0 %v84
    %94 = vmatmul.bf16.gmra.mxu0 %v78
    %v95 = vpop.f32.mrf.mxu0
    %v96 = vadd.f32 %v49, %v95
    %v97 = vpop.f32.mrf.mxu0
    %v98 = vadd.f32 %v54, %v97
    %99 = vmatmul.bf16.gmra.mxu0 %v81
    %v100 = vpop.f32.mrf.mxu0
    %v101 = vadd.f32 %v59, %v100
    %v102 = vpop.f32.mrf.mxu0
    %v103 = vadd.f32 %v64, %v102
    %104 = vdwg.mxu0
    %v105 = vmax.f32 %v96, 0.0
    %v106 = vmax.f32 %v98, 0.0
    %v107 = vmax.f32 %v101, 0.0
    %v108 = vmax.f32 %v103, 0.0
    %v109 = vld [vmem:[%s2] sm:$0xf]
    %v110 = vld [vmem:[%s2 + $0x4] sm:$0xf]
    %v111 = vld [vmem:[%s2 + $0x8] sm:$0xf]
    %v112 = vld [vmem:[%s2 + $0xc] sm:$0xf]
    %v113 = vpack.c.bf16 %v106, %v105
    %v114 = vpack.c.bf16 %v108, %v107
    %s115 = scalar_lea.vmem %s7, 32
    %v116 = vld [vmem:[%s115] sm:$0xff]
    %v117 = vld [vmem:[%s115 + $0x8] sm:$0xff]
    %v118 = vld [vmem:[%s115 + $0x10] sm:$0xff]
    %v119 = vld [vmem:[%s115 + $0x18] sm:$0xff]
    %121 = vset.pattern.permute.xlu0 0
    %122 = vperm.xlu0 %121, %v116
    %v123 = vpop.permute.xlu0 %122
    %126 = vset.pattern.permute.xlu0 0
    %127 = vperm.xlu0 %126, %v117
    %v128 = vpop.permute.xlu0 %127
    %131 = vset.pattern.permute.xlu0 0
    %132 = vperm.xlu0 %131, %v118
    %v133 = vpop.permute.xlu0 %132
    %136 = vset.pattern.permute.xlu0 0
    %137 = vperm.xlu0 %136, %v119
    %v138 = vpop.permute.xlu0 %137
    %v144 = vunpack.c.l.b16 %v109
    %v145 = vunpack.c.l.b16 %v110
    %v146 = vunpack.c.l.b16 %v111
    %v147 = vunpack.c.l.b16 %v112
    %v148 = vpack.c.b16 %v145, %v144
    %v149 = vpack.c.b16 %v147, %v146
    %vm150 = vcmask 261120
    %v152 = vsel %vm150, %v148, 0
    %v155 = vsel %vm150, %v149, 0
    %157 = vmatpush.bf16.msra.mxu0 0
    %158 = vmatpush.bf16.msra.mxu0 0
    %159 = vmatpush.bf16.msra.mxu0 0
    %160 = vmatpush.bf16.msra.mxu0 0
    %161 = vmatpush.bf16.msra.mxu0 0
    %162 = vmatpush.bf16.msra.mxu0 0
    %163 = vmatpush.bf16.msra.mxu0 %v114
    %164 = vmatpush.bf16.msra.mxu0 %v113
    %165 = vmatmul.bf16.gmra.mxu0 %v152
    %v166 = vpop.f32.mrf.mxu0
    %v167 = vadd.f32 %v123, %v166
    %v168 = vpop.f32.mrf.mxu0
    %v169 = vadd.f32 %v128, %v168
    %170 = vmatmul.bf16.gmra.mxu0 %v155
    %v171 = vpop.f32.mrf.mxu0
    %v172 = vadd.f32 %v133, %v171
    %v173 = vpop.f32.mrf.mxu0
    %v174 = vadd.f32 %v138, %v173
    %175 = vdwg.mxu0
    %v176 = vmax.f32 %v167, 0.0
    %v177 = vmax.f32 %v169, 0.0
    %v178 = vmax.f32 %v172, 0.0
    %v179 = vmax.f32 %v174, 0.0
    %v180 = vld [vmem:[%s3] sm:$0xf]
    %v181 = vld [vmem:[%s3 + $0x4] sm:$0xf]
    %v182 = vld [vmem:[%s3 + $0x8] sm:$0xf]
    %v183 = vld [vmem:[%s3 + $0xc] sm:$0xf]
    %v184 = vpack.c.bf16 %v177, %v176
    %v185 = vpack.c.bf16 %v179, %v178
    %s186 = scalar_lea.vmem %s7, 64
    %v187 = vld [vmem:[%s186] sm:$0xff]
    %v188 = vld [vmem:[%s186 + $0x8] sm:$0xff]
    %v189 = vld [vmem:[%s186 + $0x10] sm:$0xff]
    %v190 = vld [vmem:[%s186 + $0x18] sm:$0xff]
    %192 = vset.pattern.permute.xlu0 0
    %193 = vperm.xlu0 %192, %v187
    %v194 = vpop.permute.xlu0 %193
    %197 = vset.pattern.permute.xlu0 0
    %198 = vperm.xlu0 %197, %v188
    %v199 = vpop.permute.xlu0 %198
    %202 = vset.pattern.permute.xlu0 0
    %203 = vperm.xlu0 %202, %v189
    %v204 = vpop.permute.xlu0 %203
    %207 = vset.pattern.permute.xlu0 0
    %208 = vperm.xlu0 %207, %v190
    %v209 = vpop.permute.xlu0 %208
    %v215 = vunpack.c.l.b16 %v180
    %v216 = vunpack.c.l.b16 %v181
    %v217 = vunpack.c.l.b16 %v182
    %v218 = vunpack.c.l.b16 %v183
    %v219 = vpack.c.b16 %v216, %v215
    %v220 = vpack.c.b16 %v218, %v217
    %v222 = vsel %vm150, %v219, 0
    %v225 = vsel %vm150, %v220, 0
    %227 = vmatpush.bf16.msra.mxu0 0
    %228 = vmatpush.bf16.msra.mxu0 0
    %229 = vmatpush.bf16.msra.mxu0 0
    %230 = vmatpush.bf16.msra.mxu0 0
    %231 = vmatpush.bf16.msra.mxu0 0
    %232 = vmatpush.bf16.msra.mxu0 0
    %233 = vmatpush.bf16.msra.mxu0 %v185
    %234 = vmatpush.bf16.msra.mxu0 %v184
    %235 = vmatmul.bf16.gmra.mxu0 %v222
    %v236 = vpop.f32.mrf.mxu0
    %v237 = vadd.f32 %v194, %v236
    %v238 = vpop.f32.mrf.mxu0
    %v239 = vadd.f32 %v199, %v238
    %240 = vmatmul.bf16.gmra.mxu0 %v225
    %v241 = vpop.f32.mrf.mxu0
    %v242 = vadd.f32 %v204, %v241
    %v243 = vpop.f32.mrf.mxu0
    %v244 = vadd.f32 %v209, %v243
    %245 = vdwg.mxu0
    %v246 = vadd.f32 %v237, %v96
    %v247 = vadd.f32 %v239, %v98
    %v248 = vadd.f32 %v242, %v101
    %v249 = vadd.f32 %v244, %v103
    %v250 = vmax.f32 %v246, 0.0
    %v251 = vmax.f32 %v247, 0.0
    %v252 = vmax.f32 %v248, 0.0
    %v253 = vmax.f32 %v249, 0.0
    %v254 = vld [vmem:[%s4] sm:$0xf]
    %v255 = vld [vmem:[%s4 + $0x4] sm:$0xf]
    %v256 = vld [vmem:[%s4 + $0x8] sm:$0xf]
    %v257 = vld [vmem:[%s4 + $0xc] sm:$0xf]
    %v258 = vpack.c.bf16 %v251, %v250
    %v259 = vpack.c.bf16 %v253, %v252
    %s260 = scalar_lea.vmem %s7, 96
    %v261 = vld [vmem:[%s260] sm:$0xff]
    %v262 = vld [vmem:[%s260 + $0x8] sm:$0xff]
    %v263 = vld [vmem:[%s260 + $0x10] sm:$0xff]
    %v264 = vld [vmem:[%s260 + $0x18] sm:$0xff]
    %266 = vset.pattern.permute.xlu0 0
    %267 = vperm.xlu0 %266, %v261
    %v268 = vpop.permute.xlu0 %267
    %271 = vset.pattern.permute.xlu0 0
    %272 = vperm.xlu0 %271, %v262
    %v273 = vpop.permute.xlu0 %272
    %276 = vset.pattern.permute.xlu0 0
    %277 = vperm.xlu0 %276, %v263
    %v278 = vpop.permute.xlu0 %277
    %281 = vset.pattern.permute.xlu0 0
    %282 = vperm.xlu0 %281, %v264
    %v283 = vpop.permute.xlu0 %282
    %v289 = vunpack.c.l.b16 %v254
    %v290 = vunpack.c.l.b16 %v255
    %v291 = vunpack.c.l.b16 %v256
    %v292 = vunpack.c.l.b16 %v257
    %v293 = vpack.c.b16 %v290, %v289
    %v294 = vpack.c.b16 %v292, %v291
    %v296 = vsel %vm150, %v293, 0
    %v299 = vsel %vm150, %v294, 0
    %301 = vmatpush.bf16.msra.mxu0 0
    %302 = vmatpush.bf16.msra.mxu0 0
    %303 = vmatpush.bf16.msra.mxu0 0
    %304 = vmatpush.bf16.msra.mxu0 0
    %305 = vmatpush.bf16.msra.mxu0 0
    %306 = vmatpush.bf16.msra.mxu0 0
    %307 = vmatpush.bf16.msra.mxu0 %v259
    %308 = vmatpush.bf16.msra.mxu0 %v258
    %309 = vmatmul.bf16.gmra.mxu0 %v296
    %v310 = vpop.f32.mrf.mxu0
    %v311 = vadd.f32 %v268, %v310
    %v312 = vpop.f32.mrf.mxu0
    %v313 = vadd.f32 %v273, %v312
    %314 = vmatmul.bf16.gmra.mxu0 %v299
    %v315 = vpop.f32.mrf.mxu0
    %v316 = vadd.f32 %v278, %v315
    %v317 = vpop.f32.mrf.mxu0
    %v318 = vadd.f32 %v283, %v317
    %319 = vdwg.mxu0
    %v320 = vmax.f32 %v311, 0.0
    %v321 = vmax.f32 %v313, 0.0
    %v322 = vmax.f32 %v316, 0.0
    %v323 = vmax.f32 %v318, 0.0
    %v324 = vld [vmem:[%s5] sm:$0xf]
    %v325 = vld [vmem:[%s5 + $0x4] sm:$0xf]
    %v326 = vld [vmem:[%s5 + $0x8] sm:$0xf]
    %v327 = vld [vmem:[%s5 + $0xc] sm:$0xf]
    %v328 = vpack.c.bf16 %v321, %v320
    %v329 = vpack.c.bf16 %v323, %v322
    %s330 = scalar_lea.vmem %s7, 128
    %v331 = vld [vmem:[%s330] sm:$0xff]
    %v332 = vld [vmem:[%s330 + $0x8] sm:$0xff]
    %v333 = vld [vmem:[%s330 + $0x10] sm:$0xff]
    %v334 = vld [vmem:[%s330 + $0x18] sm:$0xff]
    %336 = vset.pattern.permute.xlu0 0
    %337 = vperm.xlu0 %336, %v331
    %v338 = vpop.permute.xlu0 %337
    %341 = vset.pattern.permute.xlu0 0
    %342 = vperm.xlu0 %341, %v332
    %v343 = vpop.permute.xlu0 %342
    %346 = vset.pattern.permute.xlu0 0
    %347 = vperm.xlu0 %346, %v333
    %v348 = vpop.permute.xlu0 %347
    %351 = vset.pattern.permute.xlu0 0
    %352 = vperm.xlu0 %351, %v334
    %v353 = vpop.permute.xlu0 %352
    %v359 = vunpack.c.l.b16 %v324
    %v360 = vunpack.c.l.b16 %v325
    %v361 = vunpack.c.l.b16 %v326
    %v362 = vunpack.c.l.b16 %v327
    %v363 = vpack.c.b16 %v360, %v359
    %v364 = vpack.c.b16 %v362, %v361
    %v366 = vsel %vm150, %v363, 0
    %v369 = vsel %vm150, %v364, 0
    %371 = vmatpush.bf16.msra.mxu0 0
    %372 = vmatpush.bf16.msra.mxu0 0
    %373 = vmatpush.bf16.msra.mxu0 0
    %374 = vmatpush.bf16.msra.mxu0 0
    %375 = vmatpush.bf16.msra.mxu0 0
    %376 = vmatpush.bf16.msra.mxu0 0
    %377 = vmatpush.bf16.msra.mxu0 %v329
    %378 = vmatpush.bf16.msra.mxu0 %v328
    %379 = vmatmul.bf16.gmra.mxu0 %v366
    %v380 = vpop.f32.mrf.mxu0
    %v381 = vadd.f32 %v338, %v380
    %v382 = vpop.f32.mrf.mxu0
    %v383 = vadd.f32 %v343, %v382
    %384 = vmatmul.bf16.gmra.mxu0 %v369
    %v385 = vpop.f32.mrf.mxu0
    %v386 = vadd.f32 %v348, %v385
    %v387 = vpop.f32.mrf.mxu0
    %v388 = vadd.f32 %v353, %v387
    %389 = vdwg.mxu0
    %v390 = vadd.f32 %v381, %v246
    %v391 = vadd.f32 %v383, %v247
    %v392 = vadd.f32 %v386, %v248
    %v393 = vadd.f32 %v388, %v249
    %v394 = vld [vmem:[%s6] sm:$0x1]
    %v395 = vpack.c.bf16 %v391, %v390
    %v396 = vpack.c.bf16 %v393, %v392
    %v397 = vld [vmem:[#allocation2] sm:$0x1]
    %399 = vset.pattern.permute.xlu0 0
    %400 = vperm.xlu0 %399, %v397
    %v401 = vpop.permute.xlu0 %400
    %v403 = vperm.slane %v401, 0
    %v405 = vsel %vm150, %v394, 0
    %407 = vmatpush.bf16.msra.mxu0 0
    %408 = vmatpush.bf16.msra.mxu0 0
    %409 = vmatpush.bf16.msra.mxu0 0
    %410 = vmatpush.bf16.msra.mxu0 0
    %411 = vmatpush.bf16.msra.mxu0 0
    %412 = vmatpush.bf16.msra.mxu0 0
    %413 = vmatpush.bf16.msra.mxu0 %v396
    %414 = vmatpush.bf16.msra.mxu0 %v395
    %415 = vmatmul.bf16.gmra.mxu0 %v405
    %v416 = vpop.f32.mrf.mxu0
    %v417 = vadd.f32 %v403, %v416
    %v418 = vpop.f32.mrf.mxu0
    %419 = vdwg.mxu0
    %vm420 = vcmask 57344
    %421 = vst.msk [vmem:[#allocation3] sm:$0x1] %vm420, %v417
    // Predicated region
    $region38: #{tpu_custom_call.1} parent=1 // pred_check
      _
    $region39: #{tpu_custom_call.1} parent=1 // pred_check_branch
      %423 = sbr.rel (0) target = $region41
    $region40: #{tpu_custom_call.1} parent=1 // pred_region
      %425 = vsyncadd [#allocation4], 0
      %s427 = sshll.u32 [#allocation3], 4
      %s428 = int_to_ptr.vmem [resolvable:$true] %s427
      %s429 = sshll.u32 %s9, 4
      %s430 = int_to_ptr.hbm [resolvable:$true] %s429
      %432 = dma.vmem_to_hbm [thread:$0]  %s428, 16, %s430, [#allocation4]
    $region41: #{tpu_custom_call.1} parent=1 // pred_fallthru
      _
    // Predicated region
    $region42: #{tpu_custom_call.1} parent=1 // pred_check
      _
    $region43: #{tpu_custom_call.1} parent=1 // pred_check_branch
      %434 = sbr.rel (0) target = $region45
    $region44: #{tpu_custom_call.1} parent=1 // pred_region
      %436 = dma.done [#allocation4], 16
    $region45: #{tpu_custom_call.1} parent=1 // pred_fallthru
      _
    %437 = vsyncpa [#allocation4], 1

// kernel: tpu_custom_call.1
$region0: #{tpu_custom_call.1}
  #allocation0 [shape = 'u32[]', space=smem, size = 0x4, offset = 0x4, fixed_abs, tag = 'smem constant byte address 0x4 - core index']
  #allocation1 [shape = 'u32[72,128]{1,0:T(1,128)}', space=vmem, size = 0x9000, scoped, tag = 'internal scratch']
  #allocation2 [shape = 'f32[1,1]{1,0:T(1,128)S(1)}', space=vmem, size = 0x200, scoped, tag = 'scoped memory for tpu_custom_call.1']
  %s0 = inlined_call_operand.vmem [shape: f32[8,12], index: 0, kind: input, shape index: {}]
  %s1 = inlined_call_operand.vmem [shape: bf16[32,12], index: 1, kind: input, shape index: {}]
  %s2 = inlined_call_operand.vmem [shape: bf16[32,32], index: 2, kind: input, shape index: {}]
  %s3 = inlined_call_operand.vmem [shape: bf16[32,32], index: 3, kind: input, shape index: {}]
  %s4 = inlined_call_operand.vmem [shape: bf16[32,32], index: 4, kind: input, shape index: {}]
  %s5 = inlined_call_operand.vmem [shape: bf16[32,32], index: 5, kind: input, shape index: {}]
  %s6 = inlined_call_operand.vmem [shape: bf16[1,32], index: 6, kind: input, shape index: {}]
  %s7 = inlined_call_operand.vmem [shape: f32[5,32,1], index: 7, kind: input, shape index: {}]
  %s8 = inlined_call_operand.<no memory space> [shape: f32[1,1], index: 8, kind: input, shape index: {}]
  %s9 = inlined_call_operand.hbm [shape: f32[1,8], index: 9, kind: output, shape index: {}]
  %s10 = sld [smem:[#allocation0]]
  $region46: #{tpu_custom_call.1} parent=0
    _
  %s12 = ssub.s32 1, %s10
  %s13 = scalar_select 0, %s12, %s10
  %v14 = vstv %s8
  %15 = vst [vmem:[#allocation2] sm:$0x1] %v14
  $region1: #{tpu_custom_call.1} parent=0
    #allocation3 [shape = 'u8[512]{0}', space=vmem, size = 0x400, scoped, tag = 'output window, operand 0, single buffered']
    #allocation4 [shape = 's32[1]{0}', space=sflag, size = 0x4, scoped, tag = 'scoped memory for tpu_custom_call.1']
    %16 = vsyncpa [#allocation4], 0
    // Predicated region
    $region2: #{tpu_custom_call.1} parent=1 // pred_check
      _
    $region3: #{tpu_custom_call.1} parent=1 // pred_check_branch
      %18 = sbr.rel (0) target = $region5
    $region4: #{tpu_custom_call.1} parent=1 // pred_region
      _
    $region5: #{tpu_custom_call.1} parent=1 // pred_fallthru
      _
    // Predicated region
    $region6: #{tpu_custom_call.1} parent=1 // pred_check
      _
    $region7: #{tpu_custom_call.1} parent=1 // pred_check_branch
      %20 = sbr.rel (0) target = $region9
    $region8: #{tpu_custom_call.1} parent=1 // pred_region
      _
    $region9: #{tpu_custom_call.1} parent=1 // pred_fallthru
      _
    // Predicated region
    $region10: #{tpu_custom_call.1} parent=1 // pred_check
      _
    $region11: #{tpu_custom_call.1} parent=1 // pred_check_branch
      %22 = sbr.rel (0) target = $region13
    $region12: #{tpu_custom_call.1} parent=1 // pred_region
      _
    $region13: #{tpu_custom_call.1} parent=1 // pred_fallthru
      _
    // Predicated region
    $region14: #{tpu_custom_call.1} parent=1 // pred_check
      _
    $region15: #{tpu_custom_call.1} parent=1 // pred_check_branch
      %24 = sbr.rel (0) target = $region17
    $region16: #{tpu_custom_call.1} parent=1 // pred_region
      _
    $region17: #{tpu_custom_call.1} parent=1 // pred_fallthru
      _
    // Predicated region
    $region18: #{tpu_custom_call.1} parent=1 // pred_check
      _
    $region19: #{tpu_custom_call.1} parent=1 // pred_check_branch
      %26 = sbr.rel (0) target = $region21
    $region20: #{tpu_custom_call.1} parent=1 // pred_region
      _
    $region21: #{tpu_custom_call.1} parent=1 // pred_fallthru
      _
    // Predicated region
    $region22: #{tpu_custom_call.1} parent=1 // pred_check
      _
    $region23: #{tpu_custom_call.1} parent=1 // pred_check_branch
      %28 = sbr.rel (0) target = $region25
    $region24: #{tpu_custom_call.1} parent=1 // pred_region
      _
    $region25: #{tpu_custom_call.1} parent=1 // pred_fallthru
      _
    // Predicated region
    $region26: #{tpu_custom_call.1} parent=1 // pred_check
      _
    $region27: #{tpu_custom_call.1} parent=1 // pred_check_branch
      %30 = sbr.rel (0) target = $region29
    $region28: #{tpu_custom_call.1} parent=1 // pred_region
      _
    $region29: #{tpu_custom_call.1} parent=1 // pred_fallthru
      _
    // Predicated region
    $region30: #{tpu_custom_call.1} parent=1 // pred_check
      _
    $region31: #{tpu_custom_call.1} parent=1 // pred_check_branch
      %32 = sbr.rel (0) target = $region33
    $region32: #{tpu_custom_call.1} parent=1 // pred_region
      _
    $region33: #{tpu_custom_call.1} parent=1 // pred_fallthru
      _
    // Predicated region
    $region34: #{tpu_custom_call.1} parent=1 // pred_check
      _
    $region35: #{tpu_custom_call.1} parent=1 // pred_check_branch
      %34 = sbr.rel (0) target = $region37
    $region36: #{tpu_custom_call.1} parent=1 // pred_region
      _
    $region37: #{tpu_custom_call.1} parent=1 // pred_fallthru
      _
    %v36 = vld [vmem:[%s1] sm:$0xf]
    %v37 = vld [vmem:[%s1 + $0x4] sm:$0xf]
    %v38 = vld [vmem:[%s1 + $0x8] sm:$0xf]
    %v39 = vld [vmem:[%s1 + $0xc] sm:$0xf]
    %v40 = vld [vmem:[%s0] sm:$0xff]
    %v41 = vpack.c.bf16 %v40, %v40
    %v42 = vld [vmem:[%s7] sm:$0xff]
    %v43 = vld [vmem:[%s7 + $0x8] sm:$0xff]
    %v44 = vld [vmem:[%s7 + $0x10] sm:$0xff]
    %v45 = vld [vmem:[%s7 + $0x18] sm:$0xff]
    %47 = vset.pattern.permute.xlu0 0
    %48 = vperm.xlu0 %47, %v42
    %v49 = vpop.permute.xlu0 %48
    %52 = vset.pattern.permute.xlu0 0
    %53 = vperm.xlu0 %52, %v43
    %v54 = vpop.permute.xlu0 %53
    %57 = vset.pattern.permute.xlu0 0
    %58 = vperm.xlu0 %57, %v44
    %v59 = vpop.permute.xlu0 %58
    %62 = vset.pattern.permute.xlu0 0
    %63 = vperm.xlu0 %62, %v45
    %v64 = vpop.permute.xlu0 %63
    %v70 = vunpack.c.l.b16 %v36
    %v71 = vunpack.c.l.b16 %v37
    %v72 = vunpack.c.l.b16 %v38
    %v73 = vunpack.c.l.b16 %v39
    %v74 = vpack.c.b16 %v71, %v70
    %v75 = vpack.c.b16 %v73, %v72
    %vm76 = vcmask 97280
    %v78 = vsel %vm76, %v74, 0
    %v81 = vsel %vm76, %v75, 0
    %v84 = vsel %vm76, %v41, 0
    %86 = vmatpush.bf16.xpose.msra.mxu0 0
    %87 = vmatpush.bf16.xpose.msra.mxu0 0
    %88 = vmatpush.bf16.xpose.msra.mxu0 0
    %89 = vmatpush.bf16.xpose.msra.mxu0 0
    %90 = vmatpush.bf16.xpose.msra.mxu0 0
    %91 = vmatpush.bf16.xpose.msra.mxu0 0
    %92 = vmatpush.bf16.xpose.msra.mxu0 0
    %93 = vmatpush.bf16.xpose.msra.mxu0 %v84
    %94 = vmatmul.bf16.gmra.mxu0 %v78
    %v95 = vpop.f32.mrf.mxu0
    %v96 = vadd.f32 %v49, %v95
    %v97 = vpop.f32.mrf.mxu0
    %v98 = vadd.f32 %v54, %v97
    %99 = vmatmul.bf16.gmra.mxu0 %v81
    %v100 = vpop.f32.mrf.mxu0
    %v101 = vadd.f32 %v59, %v100
    %v102 = vpop.f32.mrf.mxu0
    %v103 = vadd.f32 %v64, %v102
    %104 = vdwg.mxu0
    %v105 = vmax.f32 %v96, 0.0
    %v106 = vmax.f32 %v98, 0.0
    %v107 = vmax.f32 %v101, 0.0
    %v108 = vmax.f32 %v103, 0.0
    %v109 = vld [vmem:[%s2] sm:$0xf]
    %v110 = vld [vmem:[%s2 + $0x4] sm:$0xf]
    %v111 = vld [vmem:[%s2 + $0x8] sm:$0xf]
    %v112 = vld [vmem:[%s2 + $0xc] sm:$0xf]
    %v113 = vpack.c.bf16 %v106, %v105
    %v114 = vpack.c.bf16 %v108, %v107
    %s115 = scalar_lea.vmem %s7, 32
    %v116 = vld [vmem:[%s115] sm:$0xff]
    %v117 = vld [vmem:[%s115 + $0x8] sm:$0xff]
    %v118 = vld [vmem:[%s115 + $0x10] sm:$0xff]
    %v119 = vld [vmem:[%s115 + $0x18] sm:$0xff]
    %121 = vset.pattern.permute.xlu0 0
    %122 = vperm.xlu0 %121, %v116
    %v123 = vpop.permute.xlu0 %122
    %126 = vset.pattern.permute.xlu0 0
    %127 = vperm.xlu0 %126, %v117
    %v128 = vpop.permute.xlu0 %127
    %131 = vset.pattern.permute.xlu0 0
    %132 = vperm.xlu0 %131, %v118
    %v133 = vpop.permute.xlu0 %132
    %136 = vset.pattern.permute.xlu0 0
    %137 = vperm.xlu0 %136, %v119
    %v138 = vpop.permute.xlu0 %137
    %v144 = vunpack.c.l.b16 %v109
    %v145 = vunpack.c.l.b16 %v110
    %v146 = vunpack.c.l.b16 %v111
    %v147 = vunpack.c.l.b16 %v112
    %v148 = vpack.c.b16 %v145, %v144
    %v149 = vpack.c.b16 %v147, %v146
    %vm150 = vcmask 261120
    %v152 = vsel %vm150, %v148, 0
    %v155 = vsel %vm150, %v149, 0
    %157 = vmatpush.bf16.msra.mxu0 0
    %158 = vmatpush.bf16.msra.mxu0 0
    %159 = vmatpush.bf16.msra.mxu0 0
    %160 = vmatpush.bf16.msra.mxu0 0
    %161 = vmatpush.bf16.msra.mxu0 0
    %162 = vmatpush.bf16.msra.mxu0 0
    %163 = vmatpush.bf16.msra.mxu0 %v114
    %164 = vmatpush.bf16.msra.mxu0 %v113
    %165 = vmatmul.bf16.gmra.mxu0 %v152
    %v166 = vpop.f32.mrf.mxu0
    %v167 = vadd.f32 %v123, %v166
    %v168 = vpop.f32.mrf.mxu0
    %v169 = vadd.f32 %v128, %v168
    %170 = vmatmul.bf16.gmra.mxu0 %v155
    %v171 = vpop.f32.mrf.mxu0
    %v172 = vadd.f32 %v133, %v171
    %v173 = vpop.f32.mrf.mxu0
    %v174 = vadd.f32 %v138, %v173
    %175 = vdwg.mxu0
    %v176 = vmax.f32 %v167, 0.0
    %v177 = vmax.f32 %v169, 0.0
    %v178 = vmax.f32 %v172, 0.0
    %v179 = vmax.f32 %v174, 0.0
    %v180 = vld [vmem:[%s3] sm:$0xf]
    %v181 = vld [vmem:[%s3 + $0x4] sm:$0xf]
    %v182 = vld [vmem:[%s3 + $0x8] sm:$0xf]
    %v183 = vld [vmem:[%s3 + $0xc] sm:$0xf]
    %v184 = vpack.c.bf16 %v177, %v176
    %v185 = vpack.c.bf16 %v179, %v178
    %s186 = scalar_lea.vmem %s7, 64
    %v187 = vld [vmem:[%s186] sm:$0xff]
    %v188 = vld [vmem:[%s186 + $0x8] sm:$0xff]
    %v189 = vld [vmem:[%s186 + $0x10] sm:$0xff]
    %v190 = vld [vmem:[%s186 + $0x18] sm:$0xff]
    %192 = vset.pattern.permute.xlu0 0
    %193 = vperm.xlu0 %192, %v187
    %v194 = vpop.permute.xlu0 %193
    %197 = vset.pattern.permute.xlu0 0
    %198 = vperm.xlu0 %197, %v188
    %v199 = vpop.permute.xlu0 %198
    %202 = vset.pattern.permute.xlu0 0
    %203 = vperm.xlu0 %202, %v189
    %v204 = vpop.permute.xlu0 %203
    %207 = vset.pattern.permute.xlu0 0
    %208 = vperm.xlu0 %207, %v190
    %v209 = vpop.permute.xlu0 %208
    %v215 = vunpack.c.l.b16 %v180
    %v216 = vunpack.c.l.b16 %v181
    %v217 = vunpack.c.l.b16 %v182
    %v218 = vunpack.c.l.b16 %v183
    %v219 = vpack.c.b16 %v216, %v215
    %v220 = vpack.c.b16 %v218, %v217
    %v222 = vsel %vm150, %v219, 0
    %v225 = vsel %vm150, %v220, 0
    %227 = vmatpush.bf16.msra.mxu0 0
    %228 = vmatpush.bf16.msra.mxu0 0
    %229 = vmatpush.bf16.msra.mxu0 0
    %230 = vmatpush.bf16.msra.mxu0 0
    %231 = vmatpush.bf16.msra.mxu0 0
    %232 = vmatpush.bf16.msra.mxu0 0
    %233 = vmatpush.bf16.msra.mxu0 %v185
    %234 = vmatpush.bf16.msra.mxu0 %v184
    %235 = vmatmul.bf16.gmra.mxu0 %v222
    %v236 = vpop.f32.mrf.mxu0
    %v237 = vadd.f32 %v194, %v236
    %v238 = vpop.f32.mrf.mxu0
    %v239 = vadd.f32 %v199, %v238
    %240 = vmatmul.bf16.gmra.mxu0 %v225
    %v241 = vpop.f32.mrf.mxu0
    %v242 = vadd.f32 %v204, %v241
    %v243 = vpop.f32.mrf.mxu0
    %v244 = vadd.f32 %v209, %v243
    %245 = vdwg.mxu0
    %v246 = vadd.f32 %v237, %v96
    %v247 = vadd.f32 %v239, %v98
    %v248 = vadd.f32 %v242, %v101
    %v249 = vadd.f32 %v244, %v103
    %v250 = vmax.f32 %v246, 0.0
    %v251 = vmax.f32 %v247, 0.0
    %v252 = vmax.f32 %v248, 0.0
    %v253 = vmax.f32 %v249, 0.0
    %v254 = vld [vmem:[%s4] sm:$0xf]
    %v255 = vld [vmem:[%s4 + $0x4] sm:$0xf]
    %v256 = vld [vmem:[%s4 + $0x8] sm:$0xf]
    %v257 = vld [vmem:[%s4 + $0xc] sm:$0xf]
    %v258 = vpack.c.bf16 %v251, %v250
    %v259 = vpack.c.bf16 %v253, %v252
    %s260 = scalar_lea.vmem %s7, 96
    %v261 = vld [vmem:[%s260] sm:$0xff]
    %v262 = vld [vmem:[%s260 + $0x8] sm:$0xff]
    %v263 = vld [vmem:[%s260 + $0x10] sm:$0xff]
    %v264 = vld [vmem:[%s260 + $0x18] sm:$0xff]
    %266 = vset.pattern.permute.xlu0 0
    %267 = vperm.xlu0 %266, %v261
    %v268 = vpop.permute.xlu0 %267
    %271 = vset.pattern.permute.xlu0 0
    %272 = vperm.xlu0 %271, %v262
    %v273 = vpop.permute.xlu0 %272
    %276 = vset.pattern.permute.xlu0 0
    %277 = vperm.xlu0 %276, %v263
    %v278 = vpop.permute.xlu0 %277
    %281 = vset.pattern.permute.xlu0 0
    %282 = vperm.xlu0 %281, %v264
    %v283 = vpop.permute.xlu0 %282
    %v289 = vunpack.c.l.b16 %v254
    %v290 = vunpack.c.l.b16 %v255
    %v291 = vunpack.c.l.b16 %v256
    %v292 = vunpack.c.l.b16 %v257
    %v293 = vpack.c.b16 %v290, %v289
    %v294 = vpack.c.b16 %v292, %v291
    %v296 = vsel %vm150, %v293, 0
    %v299 = vsel %vm150, %v294, 0
    %301 = vmatpush.bf16.msra.mxu0 0
    %302 = vmatpush.bf16.msra.mxu0 0
    %303 = vmatpush.bf16.msra.mxu0 0
    %304 = vmatpush.bf16.msra.mxu0 0
    %305 = vmatpush.bf16.msra.mxu0 0
    %306 = vmatpush.bf16.msra.mxu0 0
    %307 = vmatpush.bf16.msra.mxu0 %v259
    %308 = vmatpush.bf16.msra.mxu0 %v258
    %309 = vmatmul.bf16.gmra.mxu0 %v296
    %v310 = vpop.f32.mrf.mxu0
    %v311 = vadd.f32 %v268, %v310
    %v312 = vpop.f32.mrf.mxu0
    %v313 = vadd.f32 %v273, %v312
    %314 = vmatmul.bf16.gmra.mxu0 %v299
    %v315 = vpop.f32.mrf.mxu0
    %v316 = vadd.f32 %v278, %v315
    %v317 = vpop.f32.mrf.mxu0
    %v318 = vadd.f32 %v283, %v317
    %319 = vdwg.mxu0
    %v320 = vmax.f32 %v311, 0.0
    %v321 = vmax.f32 %v313, 0.0
    %v322 = vmax.f32 %v316, 0.0
    %v323 = vmax.f32 %v318, 0.0
    %v324 = vld [vmem:[%s5] sm:$0xf]
    %v325 = vld [vmem:[%s5 + $0x4] sm:$0xf]
    %v326 = vld [vmem:[%s5 + $0x8] sm:$0xf]
    %v327 = vld [vmem:[%s5 + $0xc] sm:$0xf]
    %v328 = vpack.c.bf16 %v321, %v320
    %v329 = vpack.c.bf16 %v323, %v322
    %s330 = scalar_lea.vmem %s7, 128
    %v331 = vld [vmem:[%s330] sm:$0xff]
    %v332 = vld [vmem:[%s330 + $0x8] sm:$0xff]
    %v333 = vld [vmem:[%s330 + $0x10] sm:$0xff]
    %v334 = vld [vmem:[%s330 + $0x18] sm:$0xff]
    %336 = vset.pattern.permute.xlu0 0
    %337 = vperm.xlu0 %336, %v331
    %v338 = vpop.permute.xlu0 %337
    %341 = vset.pattern.permute.xlu0 0
    %342 = vperm.xlu0 %341, %v332
    %v343 = vpop.permute.xlu0 %342
    %346 = vset.pattern.permute.xlu0 0
    %347 = vperm.xlu0 %346, %v333
    %v348 = vpop.permute.xlu0 %347
    %351 = vset.pattern.permute.xlu0 0
    %352 = vperm.xlu0 %351, %v334
    %v353 = vpop.permute.xlu0 %352
    %v359 = vunpack.c.l.b16 %v324
    %v360 = vunpack.c.l.b16 %v325
    %v361 = vunpack.c.l.b16 %v326
    %v362 = vunpack.c.l.b16 %v327
    %v363 = vpack.c.b16 %v360, %v359
    %v364 = vpack.c.b16 %v362, %v361
    %v366 = vsel %vm150, %v363, 0
    %v369 = vsel %vm150, %v364, 0
    %371 = vmatpush.bf16.msra.mxu0 0
    %372 = vmatpush.bf16.msra.mxu0 0
    %373 = vmatpush.bf16.msra.mxu0 0
    %374 = vmatpush.bf16.msra.mxu0 0
    %375 = vmatpush.bf16.msra.mxu0 0
    %376 = vmatpush.bf16.msra.mxu0 0
    %377 = vmatpush.bf16.msra.mxu0 %v329
    %378 = vmatpush.bf16.msra.mxu0 %v328
    %379 = vmatmul.bf16.gmra.mxu0 %v366
    %v380 = vpop.f32.mrf.mxu0
    %v381 = vadd.f32 %v338, %v380
    %v382 = vpop.f32.mrf.mxu0
    %v383 = vadd.f32 %v343, %v382
    %384 = vmatmul.bf16.gmra.mxu0 %v369
    %v385 = vpop.f32.mrf.mxu0
    %v386 = vadd.f32 %v348, %v385
    %v387 = vpop.f32.mrf.mxu0
    %v388 = vadd.f32 %v353, %v387
    %389 = vdwg.mxu0
    %v390 = vadd.f32 %v381, %v246
    %v391 = vadd.f32 %v383, %v247
    %v392 = vadd.f32 %v386, %v248
    %v393 = vadd.f32 %v388, %v249
    %v394 = vld [vmem:[%s6] sm:$0x1]
    %v395 = vpack.c.bf16 %v391, %v390
    %v396 = vpack.c.bf16 %v393, %v392
    %v397 = vld [vmem:[#allocation2] sm:$0x1]
    %399 = vset.pattern.permute.xlu0 0
    %400 = vperm.xlu0 %399, %v397
    %v401 = vpop.permute.xlu0 %400
    %v403 = vperm.slane %v401, 0
    %v405 = vsel %vm150, %v394, 0
    %407 = vmatpush.bf16.msra.mxu0 0
    %408 = vmatpush.bf16.msra.mxu0 0
    %409 = vmatpush.bf16.msra.mxu0 0
    %410 = vmatpush.bf16.msra.mxu0 0
    %411 = vmatpush.bf16.msra.mxu0 0
    %412 = vmatpush.bf16.msra.mxu0 0
    %413 = vmatpush.bf16.msra.mxu0 %v396
    %414 = vmatpush.bf16.msra.mxu0 %v395
    %415 = vmatmul.bf16.gmra.mxu0 %v405
    %v416 = vpop.f32.mrf.mxu0
    %v417 = vadd.f32 %v403, %v416
    %v418 = vpop.f32.mrf.mxu0
    %419 = vdwg.mxu0
    %vm420 = vcmask 57344
    %421 = vst.msk [vmem:[#allocation3] sm:$0x1] %vm420, %v417
    // Predicated region
    $region38: #{tpu_custom_call.1} parent=1 // pred_check
      _
    $region39: #{tpu_custom_call.1} parent=1 // pred_check_branch
      %423 = sbr.rel (0) target = $region41
    $region40: #{tpu_custom_call.1} parent=1 // pred_region
      %425 = vsyncadd [#allocation4], 0
      %s427 = sshll.u32 [#allocation3], 4
      %s428 = int_to_ptr.vmem [resolvable:$true] %s427
      %s429 = sshll.u32 %s9, 4
      %s430 = int_to_ptr.hbm [resolvable:$true] %s429
      %432 = dma.vmem_to_hbm [thread:$0]  %s428, 16, %s430, [#allocation4]
    $region41: #{tpu_custom_call.1} parent=1 // pred_fallthru
      _
    // Predicated region
    $region42: #{tpu_custom_call.1} parent=1 // pred_check
      _
    $region43: #{tpu_custom_call.1} parent=1 // pred_check_branch
      %434 = sbr.rel (0) target = $region45
    $region44: #{tpu_custom_call.1} parent=1 // pred_region
      %436 = dma.done [#allocation4], 16
    $region45: #{tpu_custom_call.1} parent=1 // pred_fallthru
      _
    %437 = vsyncpa [#allocation4], 1

</llo_original>
